<compile_context>
chip_gen: v5e
topology: v5e:2x2
jax: 0.10.0
libtpu: 0.0.40
codegen_flags: <defaults>
</compile_context>

<pallas_src>
import functools
import numpy as np
import jax
import jax.numpy as jnp
from jax.experimental import pallas as pl
from jax.experimental.pallas import tpu as pltpu


def _round_up(n, m):
    return ((n + m - 1) // m) * m


# --------------------------------------------------------------------------
# Dense path: 128 pixels folded per row, shuffle done as x @ S on the MXU.
# --------------------------------------------------------------------------
def _matmul_select_kernel(x_ref, s_ref, o_ref):
    # out[r, :] = x[r, :] @ S  -- S is a static 0/1 selection matrix, so the
    # result is an exact copy/zero-pad of the input lanes.
    o_ref[...] = jnp.dot(
        x_ref[...], s_ref[...], preferred_element_type=jnp.float32
    ).astype(o_ref.dtype)


# --------------------------------------------------------------------------
# Narrow fallback: out[:, j] = x[:, src[j]] if 0 <= src[j] < C_in else 0.
# Only used when the pixel count is not divisible by the group factor or the
# dtype is not f32/bf16.  nout is tiny (== nDecs) so a handful of selects.
# --------------------------------------------------------------------------
def _select_kernel(src, x_ref, o_ref):
    x = x_ref[...]                       # (TS, C_in): one dense block load
    ts, cin = x.shape
    nout = len(src)

    if nout == cin and tuple(src) == tuple(range(cin)):
        o_ref[...] = x                   # pure-copy fast path
        return

    lane = jax.lax.broadcasted_iota(jnp.int32, (ts, nout), 1)
    out = jnp.zeros((ts, nout), dtype=x.dtype)
    for j, s in enumerate(src):          # static, <= nDecs iterations
        if 0 <= s < cin:
            out = jnp.where(lane == j, x[:, s:s + 1], out)
    o_ref[...] = out                     # single whole-block store


def _channel_pad_permute(x_nhwc, src, *, block_pixels=131072, narrow_rows=2048):
    """(N,H,W,C_in) -> (N,H,W,len(src)); out[..., j] = x[..., src[j]] or 0."""
    N, H, W, C = x_nhwc.shape
    src = tuple(int(s) for s in src)
    nout = len(src)
    M = N * H * W
    dtype = x_nhwc.dtype

    if nout == C and src == tuple(range(C)):
        return x_nhwc                      # identity: nothing to do
    if M == 0 or C == 0 or all(not (0 <= s < C) for s in src):
        return jnp.zeros((N, H, W, nout), dtype=dtype)

    x2 = x_nhwc.reshape(M, C)              # free contiguous view, no HBM pass

    # Pick a group factor G so that G*nout (the output lane width) is a dense
    # multiple of 128 and G divides the pixel count.  Only for MXU dtypes.
    G = 1
    if dtype in (jnp.dtype(jnp.float32), jnp.dtype(jnp.bfloat16)):
        for g in (128, 64, 32):
            if M % g == 0 and g * nout >= 128:
                G = g
                break

    if G > 1:
        # ------------------------- lane-dense MXU path -------------------
        Mg = M // G
        K, Nw = G * C, G * nout
        xg = x2.reshape(Mg, K)              # still a free view

        # Static 0/1 selection matrix: S[g*C + src[j], g*nout + j] = 1.
        S_np = np.zeros((K, Nw), dtype=np.float32)
        for g in range(G):
            for j, s in enumerate(src):
                if 0 <= s < C:
                    S_np[g * C + s, g * nout + j] = 1.0
        S = jnp.asarray(S_np, dtype=dtype)

        tsg = min(max(block_pixels // G, 8), _round_up(Mg, 8))
        grid = (pl.cdiv(Mg, tsg),)

        out = pl.pallas_call(
            _matmul_select_kernel,
            out_shape=jax.ShapeDtypeStruct((Mg, Nw), dtype),
            grid_spec=pltpu.PrefetchScalarGridSpec(
                num_scalar_prefetch=0,
                grid=grid,
                in_specs=[pl.BlockSpec((tsg, K), lambda i: (i, 0)),
                          pl.BlockSpec((K, Nw), lambda i: (0, 0))],
                out_specs=pl.BlockSpec((tsg, Nw), lambda i: (i, 0)),
            ),
            compiler_params=pltpu.CompilerParams(
                dimension_semantics=("parallel",)),
        )(xg, S)
        return out.reshape(N, H, W, nout)

    # ----------------------------- narrow fallback -----------------------
    sub = 8 if dtype.itemsize >= 4 else (16 if dtype.itemsize == 2 else 32)
    ts = min(_round_up(narrow_rows, sub), _round_up(M, sub))
    grid = (pl.cdiv(M, ts),)

    out = pl.pallas_call(
        functools.partial(_select_kernel, src),
        out_shape=jax.ShapeDtypeStruct((M, nout), dtype),
        grid_spec=pltpu.PrefetchScalarGridSpec(
            num_scalar_prefetch=0,
            grid=grid,
            in_specs=[pl.BlockSpec((ts, C), lambda i: (i, 0))],
            out_specs=pl.BlockSpec((ts, nout), lambda i: (i, 0)),
        ),
        compiler_params=pltpu.CompilerParams(
            dimension_semantics=("parallel",)),
    )(x2)
    return out.reshape(N, H, W, nout)


def adjoint_truncation_layer(X, *, stride=(2, 2), nlevels=0, mode="normal"):
    """JAX/Pallas equivalent of AdjointTruncationLayer.forward."""
    if mode not in ("normal", "interleave"):
        raise ValueError("mode must be either 'normal' or 'interleave'")
    if mode == "interleave" and nlevels != 0:
        raise ValueError("mode = 'interleave' is only supported when nlevels = 0")

    nDecs = stride[0] * stride[1]

    if nlevels == 0:
        # Output channel j sources padded channel indices[j]; indices that
        # land beyond the input channel count read the zero padding.
        if mode == "interleave":
            indices = np.arange(nDecs).reshape(-1, 2).T.flatten()
        else:
            indices = np.arange(nDecs)
        return _channel_pad_permute(X, tuple(int(i) for i in indices))

    # nlevels > 0: host-side tuple plumbing; only the last real stage needs
    # the kernel (zero-pad of its channel axis up to nDecs - 1).
    # TODO(synk): the fresh all-zero stages are plain jnp.zeros (no compute).
    nstages = len(X)
    Z = []
    nsamples = nrows_ = ncols_ = None
    last_dtype = None
    for istage in range(nlevels + 1):
        if istage == 0 or istage < nstages - 1:
            X_i = X[istage]
            nsamples, nrows_, ncols_ = X_i.shape[0], X_i.shape[1], X_i.shape[2]
            last_dtype = X_i.dtype
            Z.append(X_i)
        elif istage == nstages - 1:
            X_i = X[istage]
            nsamples, nrows_, ncols_ = X_i.shape[0], X_i.shape[1], X_i.shape[2]
            noc = X_i.shape[3]
            last_dtype = X_i.dtype
            if noc < nDecs - 1:
                Z.append(_channel_pad_permute(X_i, tuple(range(nDecs - 1))))
            else:
                Z.append(X_i)
        else:
            if istage > 1:
                nrows_ *= stride[0]
                ncols_ *= stride[1]
            Z.append(jnp.zeros((nsamples, nrows_, ncols_, nDecs - 1),
                               dtype=last_dtype))
    return tuple(Z)


def _reference_nlevels0(Xnp, nDecs, mode):
    N, H, W, C = Xnp.shape
    Z = np.zeros((N, H, W, nDecs), dtype=Xnp.dtype)
    Z[..., :C] = Xnp
    if mode == "interleave":
        idx = np.arange(nDecs).reshape(-1, 2).T.flatten()
        Z = Z[..., idx]
    return Z


if __name__ == "__main__":
    key = jax.random.PRNGKey(0)
    stride = (2, 2)
    nDecs = stride[0] * stride[1]          # 4
    N = 2

    k0, k1, k2, k3, k4, k5 = jax.random.split(key, 6)

    # --- nlevels = 0, mode = 'normal' (zero-pad channels 3 -> 4, dense path) ---
    x = jax.random.normal(k0, (N, 8, 8, 3), dtype=jnp.float32)
    z = adjoint_truncation_layer(x, stride=stride, nlevels=0, mode="normal")
    z = jax.block_until_ready(z)
    np.testing.assert_allclose(
        np.asarray(z), _reference_nlevels0(np.asarray(x), nDecs, "normal"),
        rtol=0, atol=0)

    # --- nlevels = 0, mode = 'interleave' (pad + channel permutation) ---
    zi = adjoint_truncation_layer(x, stride=stride, nlevels=0, mode="interleave")
    zi = jax.block_until_ready(zi)
    np.testing.assert_allclose(
        np.asarray(zi), _reference_nlevels0(np.asarray(x), nDecs, "interleave"),
        rtol=0, atol=0)

    # --- larger array through the dense path (M = 5120, single block) ---
    xb = jax.random.normal(k1, (N, 64, 40, 3), dtype=jnp.float32)
    zb = adjoint_truncation_layer(xb, stride=stride, nlevels=0, mode="interleave")
    zb = jax.block_until_ready(zb)
    np.testing.assert_allclose(
        np.asarray(zb), _reference_nlevels0(np.asarray(xb), nDecs, "interleave"),
        rtol=0, atol=0)

    # --- dense path, multi-block grid with a ragged last block ---
    xm = jax.random.normal(k5, (N, 64, 72, 3), dtype=jnp.float32)   # Mg = 72
    zm = _channel_pad_permute(xm, (0, 2, 1, 3), block_pixels=128 * 32)
    zm = jax.block_until_ready(zm)
    np.testing.assert_allclose(
        np.asarray(zm), _reference_nlevels0(np.asarray(xm), nDecs, "interleave"),
        rtol=0, atol=0)

    # --- bf16 through the dense MXU path (selection is bit-exact) ---
    xh = jax.random.normal(k2, (N, 8, 8, 3), dtype=jnp.float32).astype(jnp.bfloat16)
    zh = adjoint_truncation_layer(xh, stride=stride, nlevels=0, mode="normal")
    zh = jax.block_until_ready(zh)
    np.testing.assert_allclose(
        np.asarray(zh.astype(jnp.float32)),
        _reference_nlevels0(np.asarray(xh.astype(jnp.float32)), nDecs, "normal"),
        rtol=0, atol=0)

    # --- odd pixel count (M = 126): narrow fallback, ragged last block ---
    xr = jax.random.normal(k2, (N, 9, 7, 3), dtype=jnp.float32)
    zr = _channel_pad_permute(xr, (0, 2, 1, 3), narrow_rows=64)
    zr = jax.block_until_ready(zr)
    np.testing.assert_allclose(
        np.asarray(zr), _reference_nlevels0(np.asarray(xr), nDecs, "interleave"),
        rtol=0, atol=0)

    # --- nlevels > 0: tuple plumbing + kernelized zero-pad of the last stage ---
    X_stages = (
        jax.random.normal(k3, (N, 4, 4, 1), dtype=jnp.float32),
        jax.random.normal(k4, (N, 8, 8, 3), dtype=jnp.float32),
        jax.random.normal(k0, (N, 16, 16, 2), dtype=jnp.float32),   # 2 < nDecs-1
    )
    nlevels = 3   # nstages = 3 < nlevels + 1  -> also exercises the zeros branch
    Z = adjoint_truncation_layer(X_stages, stride=stride, nlevels=nlevels,
                                 mode="normal")
    Z = jax.block_until_ready(Z)
    assert len(Z) == nlevels + 1
    np.testing.assert_allclose(np.asarray(Z[0]), np.asarray(X_stages[0]))
    np.testing.assert_allclose(np.asarray(Z[1]), np.asarray(X_stages[1]))
    assert Z[2].shape == (N, 16, 16, nDecs - 1)
    np.testing.assert_allclose(np.asarray(Z[2])[..., :2], np.asarray(X_stages[2]))
    np.testing.assert_allclose(np.asarray(Z[2])[..., 2:], 0.0)
    assert Z[3].shape == (N, 32, 32, nDecs - 1)
    np.testing.assert_allclose(np.asarray(Z[3]), 0.0)

    print("KERNEL_OK")
</pallas_src>

<mosaic_0001>
module attributes {stable_mosaic.version = 11 : i64} {
  func.func @_matmul_select_kernel(%arg0: i32, %arg1: memref<8x384xf32, #tpu.memory_space<vmem>>, %arg2: memref<384x512xf32, #tpu.memory_space<vmem>>, %arg3: memref<8x512xf32, #tpu.memory_space<vmem>>) attributes {dimension_semantics = [#tpu.dimension_semantics<parallel>], iteration_bounds = array<i64: 1>, scalar_prefetch = 0 : i64, scratch_operands = 0 : i64, tpu.core_type = #tpu.core_type<tc>, window_params = [{transform_indices = @transform_0, window_bounds = array<i64: 8, 384>}, {pipeline_mode = #tpu.pipeline_mode<synchronous>, transform_indices = @transform_1, window_bounds = array<i64: 384, 512>}, {transform_indices = @transform_2, window_bounds = array<i64: 8, 512>}]} {
    %c0 = arith.constant 0 : index
    %c0_0 = arith.constant 0 : index
    %0 = vector.load %arg1[%c0, %c0_0] : memref<8x384xf32, #tpu.memory_space<vmem>>, vector<8x384xf32>
    %c0_1 = arith.constant 0 : index
    %c0_2 = arith.constant 0 : index
    %1 = vector.load %arg2[%c0_1, %c0_2] : memref<384x512xf32, #tpu.memory_space<vmem>>, vector<384x512xf32>
    %cst = arith.constant dense<0.000000e+00> : vector<8x512xf32>
    %2 = tpu.matmul %0, %1, %cst {dimension_numbers = #tpu.dot_dimension_numbers<[1], [0], [0], [1], [0, 0, 1, 1], [], []>} : vector<8x384xf32>, vector<384x512xf32>, vector<8x512xf32> -> vector<8x512xf32>
    %c0_3 = arith.constant 0 : index
    %c0_4 = arith.constant 0 : index
    %3 = vector.load %arg3[%c0_3, %c0_4] : memref<8x512xf32, #tpu.memory_space<vmem>>, vector<8x512xf32>
    tpu.vector_store %arg3[%c0_3, %c0_4], %2 {strides = array<i32>} : memref<8x512xf32, #tpu.memory_space<vmem>>, vector<8x512xf32>,
    return
  }
  func.func @transform_0(%arg0: i32) -> (i32, i32) {
    %c0_i32 = arith.constant 0 : i32
    %c0_i32_0 = arith.constant 0 : i32
    return %arg0, %c0_i32 : i32, i32
  }
  func.func @transform_1(%arg0: i32) -> (i32, i32) {
    %c0_i32 = arith.constant 0 : i32
    %c0_i32_0 = arith.constant 0 : i32
    %c0_i32_1 = arith.constant 0 : i32
    return %c0_i32, %c0_i32_0 : i32, i32
  }
  func.func @transform_2(%arg0: i32) -> (i32, i32) {
    %c0_i32 = arith.constant 0 : i32
    %c0_i32_0 = arith.constant 0 : i32
    return %arg0, %c0_i32 : i32, i32
  }
}

</mosaic_0001>

<llo_original>
// kernel: tpu_custom_call.1
$region0: #{tpu_custom_call.1}
  #allocation0 [shape = 'u32[]', space=smem, size = 0x4, offset = 0x4, fixed_abs, tag = 'smem constant byte address 0x4 - core index']
  #allocation1 [shape = 'u32[72,128]{1,0:T(1,128)}', space=vmem, size = 0x9000, scoped, tag = 'internal scratch']
  %s0 = inlined_call_operand.hbm [shape: f32[1,384], index: 0, kind: input, shape index: {}]
  %s1 = inlined_call_operand.hbm [shape: f32[384,512], index: 1, kind: input, shape index: {}]
  %s2 = inlined_call_operand.hbm [shape: f32[1,512], index: 2, kind: output, shape index: {}]
  %s3 = sld [smem:[#allocation0]]
  $region26: #{tpu_custom_call.1} parent=0
    _
  %s5 = ssub.s32 1, %s3
  %s6 = scalar_select 0, %s5, %s3
  $region1: #{tpu_custom_call.1} parent=0
    #allocation2 [shape = 'u8[12288]{0}', space=vmem, size = 0x3000, scoped, tag = 'input window, operand 0, single buffered']
    #allocation3 [shape = 's32[1]{0}', space=sflag, size = 0x4, scoped, tag = 'scoped memory for tpu_custom_call.1']
    #allocation4 [shape = 's32[1]{0}', space=sflag, size = 0x4, scoped, tag = 'scoped memory for tpu_custom_call.1']
    #allocation5 [shape = 'u8[786432]{0}', space=vmem, size = 0xc0000, scoped, tag = 'input window, operand 1, single buffered']
    #allocation6 [shape = 's32[1]{0}', space=sflag, size = 0x4, scoped, tag = 'scoped memory for tpu_custom_call.1']
    #allocation7 [shape = 'u8[16384]{0}', space=vmem, size = 0x4000, scoped, tag = 'output window, operand 0, single buffered']
    %7 = vsyncpa [#allocation3], 0
    %8 = vsyncpa [#allocation6], 0
    %9 = vsyncpa [#allocation4], 0
    // Predicated region
    $region2: #{tpu_custom_call.1} parent=1 // pred_check
      _
    $region3: #{tpu_custom_call.1} parent=1 // pred_check_branch
      %11 = sbr.rel (0) target = $region5
    $region4: #{tpu_custom_call.1} parent=1 // pred_region
      %13 = vsyncadd [#allocation3], 336
      %s14 = sshll.u32 %s0, 4
      %s15 = int_to_ptr.hbm [resolvable:$true] %s14
      %s16 = sshll.u32 [#allocation2], 4
      %s17 = int_to_ptr.vmem [resolvable:$true] %s16
      %22 = dma.hbm_to_vmem [thread:$0]  %s15, 48, %s17, [#allocation3], 48, 48, 3
    $region5: #{tpu_custom_call.1} parent=1 // pred_fallthru
      _
    // Predicated region
    $region6: #{tpu_custom_call.1} parent=1 // pred_check
      _
    $region7: #{tpu_custom_call.1} parent=1 // pred_check_branch
      %24 = sbr.rel (0) target = $region9
    $region8: #{tpu_custom_call.1} parent=1 // pred_region
      %26 = vsyncadd [#allocation6], 0
      %s27 = sshll.u32 %s1, 4
      %s28 = int_to_ptr.hbm [resolvable:$true] %s27
      %s29 = sshll.u32 [#allocation5], 4
      %s30 = int_to_ptr.vmem [resolvable:$true] %s29
      %35 = dma.hbm_to_vmem [thread:$0]  %s28, 24576, %s30, [#allocation6], 512, 512, 32
    $region9: #{tpu_custom_call.1} parent=1 // pred_fallthru
      _
    // Predicated region
    $region10: #{tpu_custom_call.1} parent=1 // pred_check
      _
    $region11: #{tpu_custom_call.1} parent=1 // pred_check_branch
      %37 = sbr.rel (0) target = $region13
    $region12: #{tpu_custom_call.1} parent=1 // pred_region
      %39 = dma.done [#allocation3], 384
    $region13: #{tpu_custom_call.1} parent=1 // pred_fallthru
      _
    // Predicated region
    $region14: #{tpu_custom_call.1} parent=1 // pred_check
      _
    $region15: #{tpu_custom_call.1} parent=1 // pred_check_branch
      %41 = sbr.rel (0) target = $region17
    $region16: #{tpu_custom_call.1} parent=1 // pred_region
      %43 = dma.done [#allocation6], 24576
    $region17: #{tpu_custom_call.1} parent=1 // pred_fallthru
      _
    %v44 = vld [vmem:[#allocation2] sm:$0x7]
    %v45 = vld [vmem:[#allocation2 + $0x3] sm:$0x7]
    %v46 = vld [vmem:[#allocation2 + $0x6] sm:$0x7]
    %v47 = vld [vmem:[#allocation2 + $0x9] sm:$0x7]
    %v48 = vld [vmem:[#allocation2 + $0xc] sm:$0x7]
    %v49 = vld [vmem:[#allocation2 + $0xf] sm:$0x7]
    %v50 = vld [vmem:[#allocation2 + $0x12] sm:$0x7]
    %v51 = vld [vmem:[#allocation2 + $0x15] sm:$0x7]
    %v52 = vld [vmem:[#allocation5] sm:$0xff]
    %v53 = vld [vmem:[#allocation5 + $0x8] sm:$0xff]
    %v54 = vld [vmem:[#allocation5 + $0x10] sm:$0xff]
    %v55 = vld [vmem:[#allocation5 + $0x18] sm:$0xff]
    %v56 = vld [vmem:[#allocation5 + $0x20] sm:$0xff]
    %v57 = vld [vmem:[#allocation5 + $0x28] sm:$0xff]
    %v58 = vld [vmem:[#allocation5 + $0x30] sm:$0xff]
    %v59 = vld [vmem:[#allocation5 + $0x38] sm:$0xff]
    %v60 = vld [vmem:[#allocation5 + $0x40] sm:$0xff]
    %v61 = vld [vmem:[#allocation5 + $0x48] sm:$0xff]
    %v62 = vld [vmem:[#allocation5 + $0x50] sm:$0xff]
    %v63 = vld [vmem:[#allocation5 + $0x58] sm:$0xff]
    %v64 = vld [vmem:[#allocation5 + $0x60] sm:$0xff]
    %v65 = vld [vmem:[#allocation5 + $0x68] sm:$0xff]
    %v66 = vld [vmem:[#allocation5 + $0x70] sm:$0xff]
    %v67 = vld [vmem:[#allocation5 + $0x78] sm:$0xff]
    %v68 = vld [vmem:[#allocation5 + $0x80] sm:$0xff]
    %v69 = vld [vmem:[#allocation5 + $0x88] sm:$0xff]
    %v70 = vld [vmem:[#allocation5 + $0x90] sm:$0xff]
    %v71 = vld [vmem:[#allocation5 + $0x98] sm:$0xff]
    %v72 = vld [vmem:[#allocation5 + $0xa0] sm:$0xff]
    %v73 = vld [vmem:[#allocation5 + $0xa8] sm:$0xff]
    %v74 = vld [vmem:[#allocation5 + $0xb0] sm:$0xff]
    %v75 = vld [vmem:[#allocation5 + $0xb8] sm:$0xff]
    %v76 = vld [vmem:[#allocation5 + $0xc0] sm:$0xff]
    %v77 = vld [vmem:[#allocation5 + $0xc8] sm:$0xff]
    %v78 = vld [vmem:[#allocation5 + $0xd0] sm:$0xff]
    %v79 = vld [vmem:[#allocation5 + $0xd8] sm:$0xff]
    %v80 = vld [vmem:[#allocation5 + $0xe0] sm:$0xff]
    %v81 = vld [vmem:[#allocation5 + $0xe8] sm:$0xff]
    %v82 = vld [vmem:[#allocation5 + $0xf0] sm:$0xff]
    %v83 = vld [vmem:[#allocation5 + $0xf8] sm:$0xff]
    %v84 = vld [vmem:[#allocation5 + $0x100] sm:$0xff]
    %v85 = vld [vmem:[#allocation5 + $0x108] sm:$0xff]
    %v86 = vld [vmem:[#allocation5 + $0x110] sm:$0xff]
    %v87 = vld [vmem:[#allocation5 + $0x118] sm:$0xff]
    %v88 = vld [vmem:[#allocation5 + $0x120] sm:$0xff]
    %v89 = vld [vmem:[#allocation5 + $0x128] sm:$0xff]
    %v90 = vld [vmem:[#allocation5 + $0x130] sm:$0xff]
    %v91 = vld [vmem:[#allocation5 + $0x138] sm:$0xff]
    %v92 = vld [vmem:[#allocation5 + $0x140] sm:$0xff]
    %v93 = vld [vmem:[#allocation5 + $0x148] sm:$0xff]
    %v94 = vld [vmem:[#allocation5 + $0x150] sm:$0xff]
    %v95 = vld [vmem:[#allocation5 + $0x158] sm:$0xff]
    %v96 = vld [vmem:[#allocation5 + $0x160] sm:$0xff]
    %v97 = vld [vmem:[#allocation5 + $0x168] sm:$0xff]
    %v98 = vld [vmem:[#allocation5 + $0x170] sm:$0xff]
    %v99 = vld [vmem:[#allocation5 + $0x178] sm:$0xff]
    %v100 = vld [vmem:[#allocation5 + $0x180] sm:$0xff]
    %v101 = vld [vmem:[#allocation5 + $0x188] sm:$0xff]
    %v102 = vld [vmem:[#allocation5 + $0x190] sm:$0xff]
    %v103 = vld [vmem:[#allocation5 + $0x198] sm:$0xff]
    %v104 = vld [vmem:[#allocation5 + $0x1a0] sm:$0xff]
    %v105 = vld [vmem:[#allocation5 + $0x1a8] sm:$0xff]
    %v106 = vld [vmem:[#allocation5 + $0x1b0] sm:$0xff]
    %v107 = vld [vmem:[#allocation5 + $0x1b8] sm:$0xff]
    %v108 = vld [vmem:[#allocation5 + $0x1c0] sm:$0xff]
    %v109 = vld [vmem:[#allocation5 + $0x1c8] sm:$0xff]
    %v110 = vld [vmem:[#allocation5 + $0x1d0] sm:$0xff]
    %v111 = vld [vmem:[#allocation5 + $0x1d8] sm:$0xff]
    %v112 = vld [vmem:[#allocation5 + $0x1e0] sm:$0xff]
    %v113 = vld [vmem:[#allocation5 + $0x1e8] sm:$0xff]
    %v114 = vld [vmem:[#allocation5 + $0x1f0] sm:$0xff]
    %v115 = vld [vmem:[#allocation5 + $0x1f8] sm:$0xff]
    %v116 = vld [vmem:[#allocation5 + $0x200] sm:$0xff]
    %v117 = vld [vmem:[#allocation5 + $0x208] sm:$0xff]
    %v118 = vld [vmem:[#allocation5 + $0x210] sm:$0xff]
    %v119 = vld [vmem:[#allocation5 + $0x218] sm:$0xff]
    %v120 = vld [vmem:[#allocation5 + $0x220] sm:$0xff]
    %v121 = vld [vmem:[#allocation5 + $0x228] sm:$0xff]
    %v122 = vld [vmem:[#allocation5 + $0x230] sm:$0xff]
    %v123 = vld [vmem:[#allocation5 + $0x238] sm:$0xff]
    %v124 = vld [vmem:[#allocation5 + $0x240] sm:$0xff]
    %v125 = vld [vmem:[#allocation5 + $0x248] sm:$0xff]
    %v126 = vld [vmem:[#allocation5 + $0x250] sm:$0xff]
    %v127 = vld [vmem:[#allocation5 + $0x258] sm:$0xff]
    %v128 = vld [vmem:[#allocation5 + $0x260] sm:$0xff]
    %v129 = vld [vmem:[#allocation5 + $0x268] sm:$0xff]
    %v130 = vld [vmem:[#allocation5 + $0x270] sm:$0xff]
    %v131 = vld [vmem:[#allocation5 + $0x278] sm:$0xff]
    %v132 = vld [vmem:[#allocation5 + $0x280] sm:$0xff]
    %v133 = vld [vmem:[#allocation5 + $0x288] sm:$0xff]
    %v134 = vld [vmem:[#allocation5 + $0x290] sm:$0xff]
    %v135 = vld [vmem:[#allocation5 + $0x298] sm:$0xff]
    %v136 = vld [vmem:[#allocation5 + $0x2a0] sm:$0xff]
    %v137 = vld [vmem:[#allocation5 + $0x2a8] sm:$0xff]
    %v138 = vld [vmem:[#allocation5 + $0x2b0] sm:$0xff]
    %v139 = vld [vmem:[#allocation5 + $0x2b8] sm:$0xff]
    %v140 = vld [vmem:[#allocation5 + $0x2c0] sm:$0xff]
    %v141 = vld [vmem:[#allocation5 + $0x2c8] sm:$0xff]
    %v142 = vld [vmem:[#allocation5 + $0x2d0] sm:$0xff]
    %v143 = vld [vmem:[#allocation5 + $0x2d8] sm:$0xff]
    %v144 = vld [vmem:[#allocation5 + $0x2e0] sm:$0xff]
    %v145 = vld [vmem:[#allocation5 + $0x2e8] sm:$0xff]
    %v146 = vld [vmem:[#allocation5 + $0x2f0] sm:$0xff]
    %v147 = vld [vmem:[#allocation5 + $0x2f8] sm:$0xff]
    %v148 = vld [vmem:[#allocation5 + $0x300] sm:$0xff]
    %v149 = vld [vmem:[#allocation5 + $0x308] sm:$0xff]
    %v150 = vld [vmem:[#allocation5 + $0x310] sm:$0xff]
    %v151 = vld [vmem:[#allocation5 + $0x318] sm:$0xff]
    %v152 = vld [vmem:[#allocation5 + $0x320] sm:$0xff]
    %v153 = vld [vmem:[#allocation5 + $0x328] sm:$0xff]
    %v154 = vld [vmem:[#allocation5 + $0x330] sm:$0xff]
    %v155 = vld [vmem:[#allocation5 + $0x338] sm:$0xff]
    %v156 = vld [vmem:[#allocation5 + $0x340] sm:$0xff]
    %v157 = vld [vmem:[#allocation5 + $0x348] sm:$0xff]
    %v158 = vld [vmem:[#allocation5 + $0x350] sm:$0xff]
    %v159 = vld [vmem:[#allocation5 + $0x358] sm:$0xff]
    %v160 = vld [vmem:[#allocation5 + $0x360] sm:$0xff]
    %v161 = vld [vmem:[#allocation5 + $0x368] sm:$0xff]
    %v162 = vld [vmem:[#allocation5 + $0x370] sm:$0xff]
    %v163 = vld [vmem:[#allocation5 + $0x378] sm:$0xff]
    %v164 = vld [vmem:[#allocation5 + $0x380] sm:$0xff]
    %v165 = vld [vmem:[#allocation5 + $0x388] sm:$0xff]
    %v166 = vld [vmem:[#allocation5 + $0x390] sm:$0xff]
    %v167 = vld [vmem:[#allocation5 + $0x398] sm:$0xff]
    %v168 = vld [vmem:[#allocation5 + $0x3a0] sm:$0xff]
    %v169 = vld [vmem:[#allocation5 + $0x3a8] sm:$0xff]
    %v170 = vld [vmem:[#allocation5 + $0x3b0] sm:$0xff]
    %v171 = vld [vmem:[#allocation5 + $0x3b8] sm:$0xff]
    %v172 = vld [vmem:[#allocation5 + $0x3c0] sm:$0xff]
    %v173 = vld [vmem:[#allocation5 + $0x3c8] sm:$0xff]
    %v174 = vld [vmem:[#allocation5 + $0x3d0] sm:$0xff]
    %v175 = vld [vmem:[#allocation5 + $0x3d8] sm:$0xff]
    %v176 = vld [vmem:[#allocation5 + $0x3e0] sm:$0xff]
    %v177 = vld [vmem:[#allocation5 + $0x3e8] sm:$0xff]
    %v178 = vld [vmem:[#allocation5 + $0x3f0] sm:$0xff]
    %v179 = vld [vmem:[#allocation5 + $0x3f8] sm:$0xff]
    %v180 = vld [vmem:[#allocation5 + $0x400] sm:$0xff]
    %v181 = vld [vmem:[#allocation5 + $0x408] sm:$0xff]
    %v182 = vld [vmem:[#allocation5 + $0x410] sm:$0xff]
    %v183 = vld [vmem:[#allocation5 + $0x418] sm:$0xff]
    %v184 = vld [vmem:[#allocation5 + $0x420] sm:$0xff]
    %v185 = vld [vmem:[#allocation5 + $0x428] sm:$0xff]
    %v186 = vld [vmem:[#allocation5 + $0x430] sm:$0xff]
    %v187 = vld [vmem:[#allocation5 + $0x438] sm:$0xff]
    %v188 = vld [vmem:[#allocation5 + $0x440] sm:$0xff]
    %v189 = vld [vmem:[#allocation5 + $0x448] sm:$0xff]
    %v190 = vld [vmem:[#allocation5 + $0x450] sm:$0xff]
    %v191 = vld [vmem:[#allocation5 + $0x458] sm:$0xff]
    %v192 = vld [vmem:[#allocation5 + $0x460] sm:$0xff]
    %v193 = vld [vmem:[#allocation5 + $0x468] sm:$0xff]
    %v194 = vld [vmem:[#allocation5 + $0x470] sm:$0xff]
    %v195 = vld [vmem:[#allocation5 + $0x478] sm:$0xff]
    %v196 = vld [vmem:[#allocation5 + $0x480] sm:$0xff]
    %v197 = vld [vmem:[#allocation5 + $0x488] sm:$0xff]
    %v198 = vld [vmem:[#allocation5 + $0x490] sm:$0xff]
    %v199 = vld [vmem:[#allocation5 + $0x498] sm:$0xff]
    %v200 = vld [vmem:[#allocation5 + $0x4a0] sm:$0xff]
    %v201 = vld [vmem:[#allocation5 + $0x4a8] sm:$0xff]
    %v202 = vld [vmem:[#allocation5 + $0x4b0] sm:$0xff]
    %v203 = vld [vmem:[#allocation5 + $0x4b8] sm:$0xff]
    %v204 = vld [vmem:[#allocation5 + $0x4c0] sm:$0xff]
    %v205 = vld [vmem:[#allocation5 + $0x4c8] sm:$0xff]
    %v206 = vld [vmem:[#allocation5 + $0x4d0] sm:$0xff]
    %v207 = vld [vmem:[#allocation5 + $0x4d8] sm:$0xff]
    %v208 = vld [vmem:[#allocation5 + $0x4e0] sm:$0xff]
    %v209 = vld [vmem:[#allocation5 + $0x4e8] sm:$0xff]
    %v210 = vld [vmem:[#allocation5 + $0x4f0] sm:$0xff]
    %v211 = vld [vmem:[#allocation5 + $0x4f8] sm:$0xff]
    %v212 = vld [vmem:[#allocation5 + $0x500] sm:$0xff]
    %v213 = vld [vmem:[#allocation5 + $0x508] sm:$0xff]
    %v214 = vld [vmem:[#allocation5 + $0x510] sm:$0xff]
    %v215 = vld [vmem:[#allocation5 + $0x518] sm:$0xff]
    %v216 = vld [vmem:[#allocation5 + $0x520] sm:$0xff]
    %v217 = vld [vmem:[#allocation5 + $0x528] sm:$0xff]
    %v218 = vld [vmem:[#allocation5 + $0x530] sm:$0xff]
    %v219 = vld [vmem:[#allocation5 + $0x538] sm:$0xff]
    %v220 = vld [vmem:[#allocation5 + $0x540] sm:$0xff]
    %v221 = vld [vmem:[#allocation5 + $0x548] sm:$0xff]
    %v222 = vld [vmem:[#allocation5 + $0x550] sm:$0xff]
    %v223 = vld [vmem:[#allocation5 + $0x558] sm:$0xff]
    %v224 = vld [vmem:[#allocation5 + $0x560] sm:$0xff]
    %v225 = vld [vmem:[#allocation5 + $0x568] sm:$0xff]
    %v226 = vld [vmem:[#allocation5 + $0x570] sm:$0xff]
    %v227 = vld [vmem:[#allocation5 + $0x578] sm:$0xff]
    %v228 = vld [vmem:[#allocation5 + $0x580] sm:$0xff]
    %v229 = vld [vmem:[#allocation5 + $0x588] sm:$0xff]
    %v230 = vld [vmem:[#allocation5 + $0x590] sm:$0xff]
    %v231 = vld [vmem:[#allocation5 + $0x598] sm:$0xff]
    %v232 = vld [vmem:[#allocation5 + $0x5a0] sm:$0xff]
    %v233 = vld [vmem:[#allocation5 + $0x5a8] sm:$0xff]
    %v234 = vld [vmem:[#allocation5 + $0x5b0] sm:$0xff]
    %v235 = vld [vmem:[#allocation5 + $0x5b8] sm:$0xff]
    %v236 = vld [vmem:[#allocation5 + $0x5c0] sm:$0xff]
    %v237 = vld [vmem:[#allocation5 + $0x5c8] sm:$0xff]
    %v238 = vld [vmem:[#allocation5 + $0x5d0] sm:$0xff]
    %v239 = vld [vmem:[#allocation5 + $0x5d8] sm:$0xff]
    %v240 = vld [vmem:[#allocation5 + $0x5e0] sm:$0xff]
    %v241 = vld [vmem:[#allocation5 + $0x5e8] sm:$0xff]
    %v242 = vld [vmem:[#allocation5 + $0x5f0] sm:$0xff]
    %v243 = vld [vmem:[#allocation5 + $0x5f8] sm:$0xff]
    %252 = vst [vmem:[#allocation1] ss:$9 sm:$0xff] %v44
    %s253 = scalar_lea.vmem [#allocation1], 1
    %254 = vst [vmem:[%s253] ss:$9 sm:$0xff] %v45
    %s255 = scalar_lea.vmem [#allocation1], 2
    %256 = vst [vmem:[%s255] ss:$9 sm:$0xff] %v46
    %s257 = scalar_lea.vmem [#allocation1], 3
    %258 = vst [vmem:[%s257] ss:$9 sm:$0xff] %v47
    %s259 = scalar_lea.vmem [#allocation1], 4
    %260 = vst [vmem:[%s259] ss:$9 sm:$0xff] %v48
    %s261 = scalar_lea.vmem [#allocation1], 5
    %262 = vst [vmem:[%s261] ss:$9 sm:$0xff] %v49
    %s263 = scalar_lea.vmem [#allocation1], 6
    %264 = vst [vmem:[%s263] ss:$9 sm:$0xff] %v50
    %s265 = scalar_lea.vmem [#allocation1], 7
    %266 = vst [vmem:[%s265] ss:$9 sm:$0xff] %v51
    %v267 = vld [vmem:[#allocation1] sm:$0xff]
    %v268 = vld [vmem:[#allocation1 + $0x9] sm:$0xff]
    %v269 = vld [vmem:[#allocation1 + $0x12] sm:$0xff]
    %273 = vmatpush.msra.mxu0 %v112
    %274 = vmatpush.msra.mxu0 %v108
    %275 = vmatpush.msra.mxu0 %v104
    %276 = vmatpush.msra.mxu0 %v100
    %277 = vmatpush.msra.mxu0 %v96
    %278 = vmatpush.msra.mxu0 %v92
    %279 = vmatpush.msra.mxu0 %v88
    %280 = vmatpush.msra.mxu0 %v84
    %281 = vmatpush.msra.mxu0 %v80
    %282 = vmatpush.msra.mxu0 %v76
    %283 = vmatpush.msra.mxu0 %v72
    %284 = vmatpush.msra.mxu0 %v68
    %285 = vmatpush.msra.mxu0 %v64
    %286 = vmatpush.msra.mxu0 %v60
    %287 = vmatpush.msra.mxu0 %v56
    %288 = vmatpush.msra.mxu0 %v52
    %289 = vmatmul.f32.gmra.mxu0 %v267
    %v290 = vpop.f32.mrf.mxu0
    %v291 = vadd.f32 0.0, %v290
    %292 = vdwg.mxu0
    %293 = vmatpush.msra.mxu0 %v176
    %294 = vmatpush.msra.mxu0 %v172
    %295 = vmatpush.msra.mxu0 %v168
    %296 = vmatpush.msra.mxu0 %v164
    %297 = vmatpush.msra.mxu0 %v160
    %298 = vmatpush.msra.mxu0 %v156
    %299 = vmatpush.msra.mxu0 %v152
    %300 = vmatpush.msra.mxu0 %v148
    %301 = vmatpush.msra.mxu0 %v144
    %302 = vmatpush.msra.mxu0 %v140
    %303 = vmatpush.msra.mxu0 %v136
    %304 = vmatpush.msra.mxu0 %v132
    %305 = vmatpush.msra.mxu0 %v128
    %306 = vmatpush.msra.mxu0 %v124
    %307 = vmatpush.msra.mxu0 %v120
    %308 = vmatpush.msra.mxu0 %v116
    %309 = vmatmul.f32.gmra.mxu0 %v268
    %v310 = vpop.f32.mrf.mxu0
    %v311 = vadd.f32 %v291, %v310
    %312 = vdwg.mxu0
    %313 = vmatpush.msra.mxu0 %v240
    %314 = vmatpush.msra.mxu0 %v236
    %315 = vmatpush.msra.mxu0 %v232
    %316 = vmatpush.msra.mxu0 %v228
    %317 = vmatpush.msra.mxu0 %v224
    %318 = vmatpush.msra.mxu0 %v220
    %319 = vmatpush.msra.mxu0 %v216
    %320 = vmatpush.msra.mxu0 %v212
    %321 = vmatpush.msra.mxu0 %v208
    %322 = vmatpush.msra.mxu0 %v204
    %323 = vmatpush.msra.mxu0 %v200
    %324 = vmatpush.msra.mxu0 %v196
    %325 = vmatpush.msra.mxu0 %v192
    %326 = vmatpush.msra.mxu0 %v188
    %327 = vmatpush.msra.mxu0 %v184
    %328 = vmatpush.msra.mxu0 %v180
    %329 = vmatmul.f32.gmra.mxu0 %v269
    %v330 = vpop.f32.mrf.mxu0
    %v331 = vadd.f32 %v311, %v330
    %332 = vdwg.mxu0
    %333 = vmatpush.msra.mxu0 %v113
    %334 = vmatpush.msra.mxu0 %v109
    %335 = vmatpush.msra.mxu0 %v105
    %336 = vmatpush.msra.mxu0 %v101
    %337 = vmatpush.msra.mxu0 %v97
    %338 = vmatpush.msra.mxu0 %v93
    %339 = vmatpush.msra.mxu0 %v89
    %340 = vmatpush.msra.mxu0 %v85
    %341 = vmatpush.msra.mxu0 %v81
    %342 = vmatpush.msra.mxu0 %v77
    %343 = vmatpush.msra.mxu0 %v73
    %344 = vmatpush.msra.mxu0 %v69
    %345 = vmatpush.msra.mxu0 %v65
    %346 = vmatpush.msra.mxu0 %v61
    %347 = vmatpush.msra.mxu0 %v57
    %348 = vmatpush.msra.mxu0 %v53
    %349 = vmatmul.f32.gmra.mxu0 %v267
    %v350 = vpop.f32.mrf.mxu0
    %v351 = vadd.f32 0.0, %v350
    %352 = vdwg.mxu0
    %353 = vmatpush.msra.mxu0 %v177
    %354 = vmatpush.msra.mxu0 %v173
    %355 = vmatpush.msra.mxu0 %v169
    %356 = vmatpush.msra.mxu0 %v165
    %357 = vmatpush.msra.mxu0 %v161
    %358 = vmatpush.msra.mxu0 %v157
    %359 = vmatpush.msra.mxu0 %v153
    %360 = vmatpush.msra.mxu0 %v149
    %361 = vmatpush.msra.mxu0 %v145
    %362 = vmatpush.msra.mxu0 %v141
    %363 = vmatpush.msra.mxu0 %v137
    %364 = vmatpush.msra.mxu0 %v133
    %365 = vmatpush.msra.mxu0 %v129
    %366 = vmatpush.msra.mxu0 %v125
    %367 = vmatpush.msra.mxu0 %v121
    %368 = vmatpush.msra.mxu0 %v117
    %369 = vmatmul.f32.gmra.mxu0 %v268
    %v370 = vpop.f32.mrf.mxu0
    %v371 = vadd.f32 %v351, %v370
    %372 = vdwg.mxu0
    %373 = vmatpush.msra.mxu0 %v241
    %374 = vmatpush.msra.mxu0 %v237
    %375 = vmatpush.msra.mxu0 %v233
    %376 = vmatpush.msra.mxu0 %v229
    %377 = vmatpush.msra.mxu0 %v225
    %378 = vmatpush.msra.mxu0 %v221
    %379 = vmatpush.msra.mxu0 %v217
    %380 = vmatpush.msra.mxu0 %v213
    %381 = vmatpush.msra.mxu0 %v209
    %382 = vmatpush.msra.mxu0 %v205
    %383 = vmatpush.msra.mxu0 %v201
    %384 = vmatpush.msra.mxu0 %v197
    %385 = vmatpush.msra.mxu0 %v193
    %386 = vmatpush.msra.mxu0 %v189
    %387 = vmatpush.msra.mxu0 %v185
    %388 = vmatpush.msra.mxu0 %v181
    %389 = vmatmul.f32.gmra.mxu0 %v269
    %v390 = vpop.f32.mrf.mxu0
    %v391 = vadd.f32 %v371, %v390
    %392 = vdwg.mxu0
    %393 = vmatpush.msra.mxu0 %v114
    %394 = vmatpush.msra.mxu0 %v110
    %395 = vmatpush.msra.mxu0 %v106
    %396 = vmatpush.msra.mxu0 %v102
    %397 = vmatpush.msra.mxu0 %v98
    %398 = vmatpush.msra.mxu0 %v94
    %399 = vmatpush.msra.mxu0 %v90
    %400 = vmatpush.msra.mxu0 %v86
    %401 = vmatpush.msra.mxu0 %v82
    %402 = vmatpush.msra.mxu0 %v78
    %403 = vmatpush.msra.mxu0 %v74
    %404 = vmatpush.msra.mxu0 %v70
    %405 = vmatpush.msra.mxu0 %v66
    %406 = vmatpush.msra.mxu0 %v62
    %407 = vmatpush.msra.mxu0 %v58
    %408 = vmatpush.msra.mxu0 %v54
    %409 = vmatmul.f32.gmra.mxu0 %v267
    %v410 = vpop.f32.mrf.mxu0
    %v411 = vadd.f32 0.0, %v410
    %412 = vdwg.mxu0
    %413 = vmatpush.msra.mxu0 %v178
    %414 = vmatpush.msra.mxu0 %v174
    %415 = vmatpush.msra.mxu0 %v170
    %416 = vmatpush.msra.mxu0 %v166
    %417 = vmatpush.msra.mxu0 %v162
    %418 = vmatpush.msra.mxu0 %v158
    %419 = vmatpush.msra.mxu0 %v154
    %420 = vmatpush.msra.mxu0 %v150
    %421 = vmatpush.msra.mxu0 %v146
    %422 = vmatpush.msra.mxu0 %v142
    %423 = vmatpush.msra.mxu0 %v138
    %424 = vmatpush.msra.mxu0 %v134
    %425 = vmatpush.msra.mxu0 %v130
    %426 = vmatpush.msra.mxu0 %v126
    %427 = vmatpush.msra.mxu0 %v122
    %428 = vmatpush.msra.mxu0 %v118
    %429 = vmatmul.f32.gmra.mxu0 %v268
    %v430 = vpop.f32.mrf.mxu0
    %v431 = vadd.f32 %v411, %v430
    %432 = vdwg.mxu0
    %433 = vmatpush.msra.mxu0 %v242
    %434 = vmatpush.msra.mxu0 %v238
    %435 = vmatpush.msra.mxu0 %v234
    %436 = vmatpush.msra.mxu0 %v230
    %437 = vmatpush.msra.mxu0 %v226
    %438 = vmatpush.msra.mxu0 %v222
    %439 = vmatpush.msra.mxu0 %v218
    %440 = vmatpush.msra.mxu0 %v214
    %441 = vmatpush.msra.mxu0 %v210
    %442 = vmatpush.msra.mxu0 %v206
    %443 = vmatpush.msra.mxu0 %v202
    %444 = vmatpush.msra.mxu0 %v198
    %445 = vmatpush.msra.mxu0 %v194
    %446 = vmatpush.msra.mxu0 %v190
    %447 = vmatpush.msra.mxu0 %v186
    %448 = vmatpush.msra.mxu0 %v182
    %449 = vmatmul.f32.gmra.mxu0 %v269
    %v450 = vpop.f32.mrf.mxu0
    %v451 = vadd.f32 %v431, %v450
    %452 = vdwg.mxu0
    %453 = vmatpush.msra.mxu0 %v115
    %454 = vmatpush.msra.mxu0 %v111
    %455 = vmatpush.msra.mxu0 %v107
    %456 = vmatpush.msra.mxu0 %v103
    %457 = vmatpush.msra.mxu0 %v99
    %458 = vmatpush.msra.mxu0 %v95
    %459 = vmatpush.msra.mxu0 %v91
    %460 = vmatpush.msra.mxu0 %v87
    %461 = vmatpush.msra.mxu0 %v83
    %462 = vmatpush.msra.mxu0 %v79
    %463 = vmatpush.msra.mxu0 %v75
    %464 = vmatpush.msra.mxu0 %v71
    %465 = vmatpush.msra.mxu0 %v67
    %466 = vmatpush.msra.mxu0 %v63
    %467 = vmatpush.msra.mxu0 %v59
    %468 = vmatpush.msra.mxu0 %v55
    %469 = vmatmul.f32.gmra.mxu0 %v267
    %v470 = vpop.f32.mrf.mxu0
    %v471 = vadd.f32 0.0, %v470
    %472 = vdwg.mxu0
    %473 = vmatpush.msra.mxu0 %v179
    %474 = vmatpush.msra.mxu0 %v175
    %475 = vmatpush.msra.mxu0 %v171
    %476 = vmatpush.msra.mxu0 %v167
    %477 = vmatpush.msra.mxu0 %v163
    %478 = vmatpush.msra.mxu0 %v159
    %479 = vmatpush.msra.mxu0 %v155
    %480 = vmatpush.msra.mxu0 %v151
    %481 = vmatpush.msra.mxu0 %v147
    %482 = vmatpush.msra.mxu0 %v143
    %483 = vmatpush.msra.mxu0 %v139
    %484 = vmatpush.msra.mxu0 %v135
    %485 = vmatpush.msra.mxu0 %v131
    %486 = vmatpush.msra.mxu0 %v127
    %487 = vmatpush.msra.mxu0 %v123
    %488 = vmatpush.msra.mxu0 %v119
    %489 = vmatmul.f32.gmra.mxu0 %v268
    %v490 = vpop.f32.mrf.mxu0
    %v491 = vadd.f32 %v471, %v490
    %492 = vdwg.mxu0
    %493 = vmatpush.msra.mxu0 %v243
    %494 = vmatpush.msra.mxu0 %v239
    %495 = vmatpush.msra.mxu0 %v235
    %496 = vmatpush.msra.mxu0 %v231
    %497 = vmatpush.msra.mxu0 %v227
    %498 = vmatpush.msra.mxu0 %v223
    %499 = vmatpush.msra.mxu0 %v219
    %500 = vmatpush.msra.mxu0 %v215
    %501 = vmatpush.msra.mxu0 %v211
    %502 = vmatpush.msra.mxu0 %v207
    %503 = vmatpush.msra.mxu0 %v203
    %504 = vmatpush.msra.mxu0 %v199
    %505 = vmatpush.msra.mxu0 %v195
    %506 = vmatpush.msra.mxu0 %v191
    %507 = vmatpush.msra.mxu0 %v187
    %508 = vmatpush.msra.mxu0 %v183
    %509 = vmatmul.f32.gmra.mxu0 %v269
    %v510 = vpop.f32.mrf.mxu0
    %v511 = vadd.f32 %v491, %v510
    %512 = vdwg.mxu0
    %v517 = vrot.slane %v391, 7
    %v518 = vrot.slane %v451, 6
    %v519 = vrot.slane %v511, 5
    %vm520 = vcmask 1040384
    %v521 = vsel %vm520, %v331, %v517
    %vm522 = vcmask 1042434
    %v523 = vsel %vm522, %v518, %v519
    %vm524 = vcmask 1041408
    %v525 = vsel %vm524, %v521, %v523
    %vm526 = vcmask 1041409
    %v527 = vsel %vm526, %v331, %v517
    %vm528 = vcmask 1043459
    %v529 = vsel %vm528, %v518, %v519
    %vm530 = vcmask 1042433
    %v531 = vsel %vm530, %v527, %v529
    %v532 = vrot.slane %v531, 1
    %v533 = vsel %vm522, %v331, %v517
    %vm534 = vcmask 1044484
    %v535 = vsel %vm534, %v518, %v519
    %vm536 = vcmask 1043458
    %v537 = vsel %vm536, %v533, %v535
    %v538 = vrot.slane %v537, 2
    %v539 = vsel %vm528, %v331, %v517
    %vm540 = vcmask 1045509
    %v541 = vsel %vm540, %v518, %v519
    %vm542 = vcmask 1044483
    %v543 = vsel %vm542, %v539, %v541
    %v544 = vrot.slane %v543, 3
    %v545 = vsel %vm534, %v331, %v517
    %vm546 = vcmask 1046534
    %v547 = vsel %vm546, %v518, %v519
    %vm548 = vcmask 1045508
    %v549 = vsel %vm548, %v545, %v547
    %v550 = vrot.slane %v549, 4
    %v551 = vsel %vm540, %v331, %v517
    %vm552 = vcmask 1046528
    %v553 = vsel %vm552, %v519, %v518
    %vm554 = vcmask 1046533
    %v555 = vsel %vm554, %v551, %v553
    %v556 = vrot.slane %v555, 5
    %v557 = vsel %vm546, %v331, %v517
    %v558 = vsel %vm520, %v518, %v519
    %vm559 = vcmask 1045504
    %v560 = vsel %vm559, %v558, %v557
    %v561 = vrot.slane %v560, 6
    %v562 = vsel %vm552, %v517, %v331
    %v563 = vsel %vm526, %v518, %v519
    %vm564 = vcmask 1046529
    %v565 = vsel %vm564, %v563, %v562
    %v566 = vrot.slane %v565, 7
    %v575 = vlaneseq
    %vm576 = vcmp.ge.s32.totalorder %v575, 0
    %vm577 = vcmp.lt.s32.totalorder %v575, 512
    %vm578 = vmand %vm576, %vm577
    %579 = vst.msk [vmem:[#allocation7] sm:$0xf] %vm578, %v525
    %580 = vst.msk [vmem:[#allocation7 + $0x4] sm:$0xf] %vm578, %v532
    %581 = vst.msk [vmem:[#allocation7 + $0x8] sm:$0xf] %vm578, %v538
    %582 = vst.msk [vmem:[#allocation7 + $0xc] sm:$0xf] %vm578, %v544
    %583 = vst.msk [vmem:[#allocation7 + $0x10] sm:$0xf] %vm578, %v550
    %584 = vst.msk [vmem:[#allocation7 + $0x14] sm:$0xf] %vm578, %v556
    %585 = vst.msk [vmem:[#allocation7 + $0x18] sm:$0xf] %vm578, %v561
    %586 = vst.msk [vmem:[#allocation7 + $0x1c] sm:$0xf] %vm578, %v566
    // Predicated region
    $region18: #{tpu_custom_call.1} parent=1 // pred_check
      _
    $region19: #{tpu_custom_call.1} parent=1 // pred_check_branch
      %588 = sbr.rel (0) target = $region21
    $region20: #{tpu_custom_call.1} parent=1 // pred_region
      %590 = vsyncadd [#allocation4], 448
      %s591 = sshll.u32 [#allocation7], 4
      %s592 = int_to_ptr.vmem [resolvable:$true] %s591
      %s593 = sshll.u32 %s2, 4
      %s594 = int_to_ptr.hbm [resolvable:$true] %s593
      %599 = dma.vmem_to_hbm [thread:$0]  %s592, 64, %s594, [#allocation4], 64, 64, 4
    $region21: #{tpu_custom_call.1} parent=1 // pred_fallthru
      _
    // Predicated region
    $region22: #{tpu_custom_call.1} parent=1 // pred_check
      _
    $region23: #{tpu_custom_call.1} parent=1 // pred_check_branch
      %601 = sbr.rel (0) target = $region25
    $region24: #{tpu_custom_call.1} parent=1 // pred_region
      %603 = dma.done [#allocation4], 512
    $region25: #{tpu_custom_call.1} parent=1 // pred_fallthru
      _
    %604 = vsyncpa [#allocation3], 1
    %605 = vsyncpa [#allocation6], 1
    %606 = vsyncpa [#allocation4], 1

</llo_original>
